<compile_context>
chip_gen: v6e
topology: v6e:2x2x1
jax: 0.10.0
libtpu: 0.0.40
codegen_flags: <defaults>
</compile_context>

<pallas_src>
import jax
import jax.numpy as jnp
from jax.experimental import pallas as pl
from jax.experimental.pallas import tpu as pltpu


def _round_up(v: int, m: int) -> int:
    return ((v + m - 1) // m) * m


def _pick_tm(M: int, max_tm: int) -> int:
    """Largest row tile <= max_tm, preferring one that divides M (no padding)."""
    if M <= max_tm:
        return M                                  # full dim; allowed even if not 8-aligned
    for cand in range(max_tm, 127, -8):           # multiples of 8, >= 128 rows
        if M % cand == 0:
            return cand
    return 512                                    # fall back: pad M up to a multiple of 512


def _pick_te(E_pad: int, max_te: int) -> int:
    """Largest 128-multiple column tile <= max_te that divides E_pad."""
    if E_pad <= max_te:
        return E_pad
    for cand in range(max_te, 127, -128):
        if E_pad % cand == 0:
            return cand
    return 128                                    # unreachable (128 always divides E_pad)


def _patch_embed_kernel(x_ref, w_ref, b_ref, o_ref):
    # x_ref: (TM, K_pad) bf16 patches, w_ref: (K_pad, TE) bf16, b_ref: (1, TE) f32.
    # Full K per block -> no cross-step accumulator needed; f32 accumulation on MXU.
    acc = jnp.dot(x_ref[...], w_ref[...], preferred_element_type=jnp.float32)
    o_ref[...] = (acc + b_ref[...]).astype(o_ref.dtype)


def patch_embeddings(x, weight, bias, patch_size, *, out_dtype=jnp.bfloat16):
    """Equivalent of PatchEmbeddings.forward.

    x:      (B, C, H, W)  (NCHW, like PyTorch)
    weight: (E, C, p, p)  (PyTorch Conv2d weight layout)
    bias:   (E,)
    returns (B, N, E) with N = (H//p)*(W//p)  [== flatten(conv(x)).permute(0,2,1)]

    Note: inputs are fed to the MXU in bf16 and the output is bf16 by default
    (f32 accumulation) — an intentional precision trade vs. PyTorch's f32 conv.
    """
    B, C, H, W = x.shape
    E = weight.shape[0]
    p = patch_size
    assert H % p == 0 and W % p == 0, (
        f"Input image size must be divisible by patch size, image shape: {W}, "
        f"patch size: {p}")
    nh, nw = H // p, W // p
    N = nh * nw
    K = C * p * p
    M = B * N

    # ---- host-side glue: ONE fused XLA pass (read x f32, write bf16 patches) ----
    patches = (x.reshape(B, C, nh, p, nw, p)
                 .transpose(0, 2, 4, 1, 3, 5)
                 .reshape(M, K)
                 .astype(jnp.bfloat16))                                # (M, K)
    w2d = weight.reshape(E, K).T.astype(jnp.bfloat16)                  # (K, E)   (tiny)
    b2d = bias.astype(jnp.float32).reshape(1, E)                       # (1, E)

    # ---- tile selection ----
    K_pad = _round_up(K, 128)
    E_pad = _round_up(E, 128)
    out_bytes = jnp.dtype(out_dtype).itemsize

    # Adaptive caps keep the double-buffered working set <= ~24 MiB even for
    # large patch sizes (K up to 3072), which is safe on v5e/v6e/v7x.
    max_tm = 1024 if K_pad <= 1536 else 512
    max_te = 2048 if K_pad <= 1024 else 1024

    TE = _pick_te(E_pad, max_te)
    TM = _pick_tm(M, max_tm)
    M_pad = _round_up(M, TM)

    # v7x has 2 TensorCores: make sure a 1x1 grid is split along M when possible.
    if (E_pad // TE) * (M_pad // TM) == 1 and M >= 16:
        TM = _round_up((M + 1) // 2, 8)
        M_pad = _round_up(M, TM)

    # Double-buffered VMEM footprint; derive the limit from it (cap at 48 MiB
    # so there is headroom on v7x's 64 MiB physical VMEM).
    vmem_need = 2 * (TM * K_pad * 2 + K_pad * TE * 2 + TE * 4 + TM * TE * out_bytes)
    vmem_limit = max(32 * 1024 * 1024, min(48 * 1024 * 1024, vmem_need + 8 * 1024 * 1024))

    # ---- pads (no-ops for aligned ViT shapes: K=768, E multiple of 128, TM | M) ----
    if M_pad != M or K_pad != K:
        patches = jnp.pad(patches, ((0, M_pad - M), (0, K_pad - K)))
    if K_pad != K or E_pad != E:
        w2d = jnp.pad(w2d, ((0, K_pad - K), (0, E_pad - E)))
    if E_pad != E:
        b2d = jnp.pad(b2d, ((0, 0), (0, E_pad - E)))

    grid = (E_pad // TE, M_pad // TM)   # E outer, M inner: weight tile stays resident

    out = pl.pallas_call(
        _patch_embed_kernel,
        out_shape=jax.ShapeDtypeStruct((M_pad, E_pad), out_dtype),
        grid_spec=pltpu.PrefetchScalarGridSpec(
            num_scalar_prefetch=0,
            grid=grid,
            in_specs=[
                pl.BlockSpec((TM, K_pad), lambda j, i: (i, 0)),   # patches
                pl.BlockSpec((K_pad, TE), lambda j, i: (0, j)),   # weight
                pl.BlockSpec((1, TE), lambda j, i: (0, j)),       # bias
            ],
            out_specs=pl.BlockSpec((TM, TE), lambda j, i: (i, j)),
        ),
        compiler_params=pltpu.CompilerParams(
            dimension_semantics=("parallel", "parallel"),
            vmem_limit_bytes=vmem_limit,
        ),
        cost_estimate=pl.CostEstimate(
            flops=2 * M_pad * K_pad * E_pad,
            transcendentals=0,
            bytes_accessed=(M_pad * K_pad * 2 + K_pad * E_pad * 2
                            + E_pad * 4 + M_pad * E_pad * out_bytes),
        ),
    )(patches, w2d, b2d)

    if M_pad != M or E_pad != E:
        out = out[:M, :E]
    return out.reshape(B, N, E)


if __name__ == "__main__":
    # Small, forward-consistent shapes.
    B, C, H, W = 2, 4, 16, 16
    patch_size = 4
    E = 32  # embeddings_dimensions

    key = jax.random.PRNGKey(0)
    kx, kw, kb = jax.random.split(key, 3)
    x = jax.random.normal(kx, (B, C, H, W), dtype=jnp.float32)
    # Conv2d parameter shapes: weight (E, C, p, p), bias (E,)
    weight = jax.random.normal(kw, (E, C, patch_size, patch_size), dtype=jnp.float32) * 0.02
    bias = jax.random.normal(kb, (E,), dtype=jnp.float32) * 0.02

    out = patch_embeddings(x, weight, bias, patch_size)
    out = jax.block_until_ready(out)

    # Reference check with plain JAX conv (NCHW, stride=kernel=p, no padding).
    ref = jax.lax.conv_general_dilated(
        x, weight, window_strides=(patch_size, patch_size), padding="VALID",
        dimension_numbers=("NCHW", "OIHW", "NCHW"))
    ref = ref + bias[None, :, None, None]
    ref = ref.reshape(B, E, -1).transpose(0, 2, 1)

    N = (H // patch_size) * (W // patch_size)
    assert out.shape == (B, N, E), out.shape
    # bf16 inputs/outputs with f32 accumulation: loose tolerance vs f32 conv ref.
    err = float(jnp.max(jnp.abs(out.astype(jnp.float32) - ref)))
    assert err < 3e-2, err
    print("KERNEL_OK")
</pallas_src>

<mosaic_0001>
module attributes {stable_mosaic.version = 11 : i64} {
  func.func @_patch_embed_kernel(%arg0: i32, %arg1: i32, %arg2: memref<16x128xbf16, #tpu.memory_space<vmem>>, %arg3: memref<128x128xbf16, #tpu.memory_space<vmem>>, %arg4: memref<1x128xf32, #tpu.memory_space<vmem>>, %arg5: memref<16x128xbf16, #tpu.memory_space<vmem>>) attributes {dimension_semantics = [#tpu.dimension_semantics<parallel>, #tpu.dimension_semantics<parallel>], iteration_bounds = array<i64: 1, 2>, scalar_prefetch = 0 : i64, scratch_operands = 0 : i64, tpu.core_type = #tpu.core_type<tc>, window_params = [{transform_indices = @transform_0, window_bounds = array<i64: 16, 128>}, {transform_indices = @transform_1, window_bounds = array<i64: 128, 128>}, {transform_indices = @transform_2, window_bounds = array<i64: 1, 128>}, {transform_indices = @transform_3, window_bounds = array<i64: 16, 128>}]} {
    %c0 = arith.constant 0 : index
    %c0_0 = arith.constant 0 : index
    %0 = vector.load %arg2[%c0, %c0_0] : memref<16x128xbf16, #tpu.memory_space<vmem>>, vector<16x128xbf16>
    %c0_1 = arith.constant 0 : index
    %c0_2 = arith.constant 0 : index
    %1 = vector.load %arg3[%c0_1, %c0_2] : memref<128x128xbf16, #tpu.memory_space<vmem>>, vector<128x128xbf16>
    %cst = arith.constant dense<0.000000e+00> : vector<16x128xf32>
    %2 = tpu.matmul %0, %1, %cst {dimension_numbers = #tpu.dot_dimension_numbers<[1], [0], [0], [1], [0, 0, 1, 1], [], []>} : vector<16x128xbf16>, vector<128x128xbf16>, vector<16x128xf32> -> vector<16x128xf32>
    %c0_3 = arith.constant 0 : index
    %c0_4 = arith.constant 0 : index
    %3 = vector.load %arg4[%c0_3, %c0_4] : memref<1x128xf32, #tpu.memory_space<vmem>>, vector<1x128xf32>
    %4 = vector.broadcast %3 : vector<1x128xf32> to vector<16x128xf32>
    %5 = arith.addf %2, %4 : vector<16x128xf32>
    %6 = arith.truncf %5 : vector<16x128xf32> to vector<16x128xbf16>
    %c0_5 = arith.constant 0 : index
    %c0_6 = arith.constant 0 : index
    %7 = vector.load %arg5[%c0_5, %c0_6] : memref<16x128xbf16, #tpu.memory_space<vmem>>, vector<16x128xbf16>
    tpu.vector_store %arg5[%c0_5, %c0_6], %6 {strides = array<i32>} : memref<16x128xbf16, #tpu.memory_space<vmem>>, vector<16x128xbf16>,
    return
  }
  func.func @transform_0(%arg0: i32, %arg1: i32) -> (i32, i32) {
    %c0_i32 = arith.constant 0 : i32
    %c0_i32_0 = arith.constant 0 : i32
    return %arg1, %c0_i32 : i32, i32
  }
  func.func @transform_1(%arg0: i32, %arg1: i32) -> (i32, i32) {
    %c0_i32 = arith.constant 0 : i32
    %c0_i32_0 = arith.constant 0 : i32
    return %c0_i32, %arg0 : i32, i32
  }
  func.func @transform_2(%arg0: i32, %arg1: i32) -> (i32, i32) {
    %c0_i32 = arith.constant 0 : i32
    %c0_i32_0 = arith.constant 0 : i32
    return %c0_i32, %arg0 : i32, i32
  }
  func.func @transform_3(%arg0: i32, %arg1: i32) -> (i32, i32) {
    %c0_i32 = arith.constant 0 : i32
    return %arg1, %arg0 : i32, i32
  }
}

</mosaic_0001>

<llo_original>
// kernel: tpu_custom_call.1
$region0: #{tpu_custom_call.1}
  #allocation0 [shape = 'u32[]', space=smem, size = 0x4, offset = 0x4, fixed_abs, tag = 'smem constant byte address 0x4 - core index']
  #allocation1 [shape = 'u32[144,128]{1,0:T(1,128)}', space=vmem, size = 0x12000, scoped, tag = 'internal scratch']
  %s0 = inlined_call_operand.hbm [shape: bf16[32,128], index: 0, kind: input, shape index: {}]
  %s1 = inlined_call_operand.hbm [shape: bf16[128,128], index: 1, kind: input, shape index: {}]
  %s2 = inlined_call_operand.vmem [shape: f32[1,128], index: 2, kind: input, shape index: {}]
  %s3 = inlined_call_operand.hbm [shape: bf16[32,128], index: 3, kind: output, shape index: {}]
  %s4 = sld [smem:[#allocation0]]
  $region53: #{tpu_custom_call.1} parent=0
    _
  %s6 = ssub.s32 1, %s4
  %s7 = scalar_select 0, %s6, %s4
  $region1: #{tpu_custom_call.1} parent=0
    #allocation2 [shape = 'u8[8192]{0}', space=vmem, size = 0x2000, scoped, tag = 'input window, operand 0']
    #allocation3 [shape = 's32[2]{0}', space=sflag, size = 0x8, scoped, tag = 'scoped memory for tpu_custom_call.1']
    #allocation4 [shape = 's32[2]{0}', space=sflag, size = 0x8, scoped, tag = 'scoped memory for tpu_custom_call.1']
    #allocation5 [shape = 'u8[32768]{0}', space=vmem, size = 0x8000, scoped, tag = 'input window, operand 1, single buffered']
    #allocation6 [shape = 's32[1]{0}', space=sflag, size = 0x4, scoped, tag = 'scoped memory for tpu_custom_call.1']
    #allocation7 [shape = 'u8[8192]{0}', space=vmem, size = 0x2000, scoped, tag = 'output window, operand 0']
    %8 = vsyncpa [#allocation3], 0
    %s9 = scalar_lea.sflag [#allocation3], 1
    %10 = vsyncpa %s9, 0
    %11 = vsyncpa [#allocation6], 0
    %12 = vsyncpa [#allocation4], 0
    %s13 = scalar_lea.sflag [#allocation4], 1
    %14 = vsyncpa %s13, 0
    loop: start=0, step=1, limit=4
    $region2: #{tpu_custom_call.1} parent=1 // loop_pre_header
      _
    $region3: #{tpu_custom_call.1} parent=1 // loop_header
      %s16 = sphi 0, %s20
      %p17 = scmp.ge.s32.totalorder %s16, 4
      %s23 = sphi 0, %s35
      %s24 = sphi 0, %s31
      %s25 = sphi 0, %s23
      %s26 = sphi 0, %s24
      %s27 = sphi 0, %s25
      %s28 = sphi 0, %s26
      %s38 = sphi 0, %s40
      %s41 = sphi 0, %s38
      %s42 = sphi 0, %s41
      %s58 = sphi 0, %s42
      %s64 = sphi 0, %s66
      %s67 = sphi 0, %s64
      %s68 = sphi 0, %s67
      %s84 = sphi 0, %s68
      %s90 = sphi 0, %s92
      %s93 = sphi 0, %s90
      %s94 = sphi 0, %s93
      %s110 = sphi 0, %s94
      %s118 = sphi 0, %s120
      %s121 = sphi 0, %s118
      %s122 = sphi 0, %s121
      %s138 = sphi 0, %s122
    $region4: #{tpu_custom_call.1} parent=1 // loop_header_branch
      %19 = sbr.rel (%p17) target = $region8
    $region5: #{tpu_custom_call.1} parent=1 // loop_body
      %s21 = ssub.s32 %s16, 1
      %s22 = ssub.s32 %s16, 2
      %s29 = sadd.s32 1, %s24
      %p30 = scmp.ge.s32.totalorder %s29, 2
      %s31 = scalar_select %p30, 0, %s29
      %s32 = sadd.s32 1, %s23
      %s33 = scalar_select %p30, %s32, %s23
      %p34 = scmp.ge.s32.totalorder %s33, 1
      %s35 = scalar_select %p34, 0, %s33
      %s36 = ssub.s32 %s24, %s31
      %p37 = scmp.eq.s32.totalorder %s36, 0
      %s39 = sadd.s32 %s38, 1
      %s40 = scalar_select %p37, %s38, %s39
      %p43 = pneg %p37
      %p44 = scmp.eq.s32.totalorder %s16, 1
      %p45 = por %p43, %p44
      %p46 = scmp.ne.s32.totalorder %s38, %s41
      %p47 = scmp.eq.s32.totalorder %s16, 0
      %p48 = por %p46, %p47
      %p49 = scmp.ne.s32.totalorder %s38, %s41
      %p50 = scmp.eq.s32.totalorder %s21, 1
      %p51 = por %p49, %p50
      %p52 = scmp.ne.s32.totalorder %s41, %s42
      %p53 = scmp.eq.s32.totalorder %s21, 0
      %p54 = por %p52, %p53
      %p55 = scmp.ne.s32.totalorder %s41, %s42
      %p56 = scmp.eq.s32.totalorder %s22, 1
      %p57 = por %p55, %p56
      %p59 = scmp.ne.s32.totalorder %s42, %s58
      %p60 = scmp.eq.s32.totalorder %s22, 0
      %p61 = por %p59, %p60
      %s62 = ssub.s32 %s23, %s35
      %p63 = scmp.eq.s32.totalorder %s62, 0
      %s65 = sadd.s32 %s64, 1
      %s66 = scalar_select %p63, %s64, %s65
      %p69 = pneg %p63
      %p70 = scmp.eq.s32.totalorder %s16, 1
      %p71 = por %p69, %p70
      %p72 = scmp.ne.s32.totalorder %s64, %s67
      %p73 = scmp.eq.s32.totalorder %s16, 0
      %p74 = por %p72, %p73
      %p75 = scmp.ne.s32.totalorder %s64, %s67
      %p76 = scmp.eq.s32.totalorder %s21, 1
      %p77 = por %p75, %p76
      %p78 = scmp.ne.s32.totalorder %s67, %s68
      %p79 = scmp.eq.s32.totalorder %s21, 0
      %p80 = por %p78, %p79
      %p81 = scmp.ne.s32.totalorder %s67, %s68
      %p82 = scmp.eq.s32.totalorder %s22, 1
      %p83 = por %p81, %p82
      %p85 = scmp.ne.s32.totalorder %s68, %s84
      %p86 = scmp.eq.s32.totalorder %s22, 0
      %p87 = por %p85, %p86
      %s88 = ssub.s32 %s23, %s35
      %p89 = scmp.eq.s32.totalorder %s88, 0
      %s91 = sadd.s32 %s90, 1
      %s92 = scalar_select %p89, %s90, %s91
      %p95 = pneg %p89
      %p96 = scmp.eq.s32.totalorder %s16, 1
      %p97 = por %p95, %p96
      %p98 = scmp.ne.s32.totalorder %s90, %s93
      %p99 = scmp.eq.s32.totalorder %s16, 0
      %p100 = por %p98, %p99
      %p101 = scmp.ne.s32.totalorder %s90, %s93
      %p102 = scmp.eq.s32.totalorder %s21, 1
      %p103 = por %p101, %p102
      %p104 = scmp.ne.s32.totalorder %s93, %s94
      %p105 = scmp.eq.s32.totalorder %s21, 0
      %p106 = por %p104, %p105
      %p107 = scmp.ne.s32.totalorder %s93, %s94
      %p108 = scmp.eq.s32.totalorder %s22, 1
      %p109 = por %p107, %p108
      %p111 = scmp.ne.s32.totalorder %s94, %s110
      %p112 = scmp.eq.s32.totalorder %s22, 0
      %p113 = por %p111, %p112
      %s114 = ssub.s32 %s24, %s31
      %s115 = ssub.s32 %s23, %s35
      %s116 = sor.u32 %s114, %s115
      %p117 = scmp.eq.s32.totalorder %s116, 0
      %s119 = sadd.s32 %s118, 1
      %s120 = scalar_select %p117, %s118, %s119
      %p123 = pneg %p117
      %p124 = scmp.eq.s32.totalorder %s16, 1
      %p125 = por %p123, %p124
      %p126 = scmp.ne.s32.totalorder %s118, %s121
      %p127 = scmp.eq.s32.totalorder %s16, 0
      %p128 = por %p126, %p127
      %p129 = scmp.ne.s32.totalorder %s118, %s121
      %p130 = scmp.eq.s32.totalorder %s21, 1
      %p131 = por %p129, %p130
      %p132 = scmp.ne.s32.totalorder %s121, %s122
      %p133 = scmp.eq.s32.totalorder %s21, 0
      %p134 = por %p132, %p133
      %p135 = scmp.ne.s32.totalorder %s121, %s122
      %p136 = scmp.eq.s32.totalorder %s22, 1
      %p137 = por %p135, %p136
      %p139 = scmp.ne.s32.totalorder %s122, %s138
      %p140 = scmp.eq.s32.totalorder %s22, 0
      %p141 = por %p139, %p140
      %p142 = scmp.le.s32.totalorder 1, %s16
      %p143 = scmp.lt.s32.totalorder %s16, 3
      %p144 = pnand %p142, %p143
      %p145 = pneg %p144
      // Predicated region
      $region9: #{tpu_custom_call.1} parent=5 // pred_check
        _
      $region10: #{tpu_custom_call.1} parent=5 // pred_check_branch
        %147 = sbr.rel (%p144) target = $region12
      $region11: #{tpu_custom_call.1} parent=5 // pred_region
        %s148 = ssub.s32 %s16, 1
        // Predicated region
        $region13: #{tpu_custom_call.1} parent=11 // pred_check
          %p149 = pneg %p80
        $region14: #{tpu_custom_call.1} parent=11 // pred_check_branch
          %151 = sbr.rel (%p149) target = $region16
        $region15: #{tpu_custom_call.1} parent=11 // pred_region
          %s153 = ssub.s32 1024, 1024
          %154 = vsyncadd [#allocation6], %s153
          %s155 = smul.addr %s25, 64
          %s156 = scalar_lea.hbm %s1, %s155
          %s157 = sshll.u32 [#allocation5], 4
          %s158 = int_to_ptr.vmem [resolvable:$true] %s157
          %163 = dma.hbm_to_vmem [thread:$0]  %s156, 1024, %s158, [#allocation6], 64, 64, 4
        $region16: #{tpu_custom_call.1} parent=11 // pred_fallthru
          _
        // Predicated region
        $region17: #{tpu_custom_call.1} parent=11 // pred_check
          %p164 = pneg %p106
        $region18: #{tpu_custom_call.1} parent=11 // pred_check_branch
          %166 = sbr.rel (%p164) target = $region20
        $region19: #{tpu_custom_call.1} parent=11 // pred_region
          %p167 = scmp.lt.s32.totalorder %s25, 0
          %s168 = scalar_select %p167, %s25, 0
          %s169 = scalar_lea.vmem %s2, %s168
        $region20: #{tpu_custom_call.1} parent=11 // pred_fallthru
          _
      $region12: #{tpu_custom_call.1} parent=5 // pred_fallthru
        _
      %p170 = scmp.lt.s32.totalorder %s16, 2
      // Predicated region
      $region21: #{tpu_custom_call.1} parent=5 // pred_check
        %p171 = pneg %p170
      $region22: #{tpu_custom_call.1} parent=5 // pred_check_branch
        %173 = sbr.rel (%p171) target = $region24
      $region23: #{tpu_custom_call.1} parent=5 // pred_region
        // Predicated region
        $region25: #{tpu_custom_call.1} parent=23 // pred_check
          %p174 = pneg %p48
        $region26: #{tpu_custom_call.1} parent=23 // pred_check_branch
          %176 = sbr.rel (%p174) target = $region28
        $region27: #{tpu_custom_call.1} parent=23 // pred_region
          %s177 = sand.u32 %s38, 1
          %s178 = scalar_lea.sflag [#allocation3], %s177
          %s179 = sand.u32 %s38, 1
          %s180 = smul.addr %s179, 8
          %s181 = scalar_lea.vmem [#allocation2], %s180
          %s182 = smul.u32 2, %s24
          %s184 = ssub.s32 128, 128
          %185 = vsyncadd %s178, %s184
          %s186 = smul.addr %s182, 64
          %s187 = scalar_lea.hbm %s0, %s186
          %s188 = sshll.u32 %s181, 4
          %s189 = int_to_ptr.vmem [resolvable:$true] %s188
          %194 = dma.hbm_to_vmem [thread:$0]  %s187, 128, %s189, %s178, 64, 64, 4
        $region28: #{tpu_custom_call.1} parent=23 // pred_fallthru
          _
      $region24: #{tpu_custom_call.1} parent=5 // pred_fallthru
        _
      %p195 = scmp.le.s32.totalorder 1, %s16
      %p196 = scmp.lt.s32.totalorder %s16, 3
      %p197 = pnand %p195, %p196
      %p198 = pneg %p197
      // Predicated region
      $region29: #{tpu_custom_call.1} parent=5 // pred_check
        _
      $region30: #{tpu_custom_call.1} parent=5 // pred_check_branch
        %200 = sbr.rel (%p197) target = $region32
      $region31: #{tpu_custom_call.1} parent=5 // pred_region
        %s201 = ssub.s32 %s16, 1
        %s202 = sand.u32 %s41, 1
        %s203 = scalar_lea.sflag [#allocation3], %s202
        %s204 = sand.u32 %s41, 1
        %s205 = smul.addr %s204, 8
        %s206 = scalar_lea.vmem [#allocation2], %s205
        // Predicated region
        $region33: #{tpu_custom_call.1} parent=31 // pred_check
          %p207 = pneg %p54
        $region34: #{tpu_custom_call.1} parent=31 // pred_check_branch
          %209 = sbr.rel (%p207) target = $region36
        $region35: #{tpu_custom_call.1} parent=31 // pred_region
          %210 = dma.done %s203, 128
        $region36: #{tpu_custom_call.1} parent=31 // pred_fallthru
          _
        // Predicated region
        $region37: #{tpu_custom_call.1} parent=31 // pred_check
          %p211 = pneg %p80
        $region38: #{tpu_custom_call.1} parent=31 // pred_check_branch
          %213 = sbr.rel (%p211) target = $region40
        $region39: #{tpu_custom_call.1} parent=31 // pred_region
          %214 = dma.done [#allocation6], 1024
        $region40: #{tpu_custom_call.1} parent=31 // pred_fallthru
          _
        %s215 = sand.u32 %s41, 1
        %s216 = scalar_lea.sflag [#allocation3], %s215
        %s217 = sand.u32 %s41, 1
        %s218 = smul.addr %s217, 8
        %s219 = scalar_lea.vmem [#allocation2], %s218
        %p220 = pneg %p54
        %p221 = pneg %p51
        %p222 = pneg %p80
        %p223 = pneg %p77
        %p224 = scmp.lt.s32.totalorder %s25, 0
        %s225 = scalar_select %p224, %s25, 0
        %s226 = scalar_lea.vmem %s2, %s225
        %p227 = pneg %p106
        %p228 = pneg %p103
        %p229 = pneg %p134
        %p230 = pneg %p131
        %s231 = sand.u32 %s121, 1
        %s232 = scalar_lea.sflag [#allocation4], %s231
        %s233 = sand.u32 %s121, 1
        %s234 = smul.addr %s233, 8
        %s235 = scalar_lea.vmem [#allocation7], %s234
        %s236 = smul.u32 2, %s26
        %p237 = scmp.lt.s32.totalorder %s25, 0
        %s238 = scalar_select %p237, %s25, 0
        %s239 = scalar_lea.vmem %s2, %s238
        %s240 = smul.u32 2, %s26
        %v242 = vld [vmem:[%s206] sm:$0xf]
        %v243 = vld [vmem:[%s206 + $0x4] sm:$0xf]
        %v244 = vld [vmem:[#allocation5] sm:$0xf]
        %v245 = vld [vmem:[#allocation5 + $0x4] sm:$0xf]
        %v246 = vld [vmem:[#allocation5 + $0x8] sm:$0xf]
        %v247 = vld [vmem:[#allocation5 + $0xc] sm:$0xf]
        %v248 = vld [vmem:[#allocation5 + $0x10] sm:$0xf]
        %v249 = vld [vmem:[#allocation5 + $0x14] sm:$0xf]
        %v250 = vld [vmem:[#allocation5 + $0x18] sm:$0xf]
        %v251 = vld [vmem:[#allocation5 + $0x1c] sm:$0xf]
        %v252 = vld [vmem:[#allocation5 + $0x20] sm:$0xf]
        %v253 = vld [vmem:[#allocation5 + $0x24] sm:$0xf]
        %v254 = vld [vmem:[#allocation5 + $0x28] sm:$0xf]
        %v255 = vld [vmem:[#allocation5 + $0x2c] sm:$0xf]
        %v256 = vld [vmem:[#allocation5 + $0x30] sm:$0xf]
        %v257 = vld [vmem:[#allocation5 + $0x34] sm:$0xf]
        %v258 = vld [vmem:[#allocation5 + $0x38] sm:$0xf]
        %v259 = vld [vmem:[#allocation5 + $0x3c] sm:$0xf]
        %v260 = vld [vmem:[%s239] sm:$0x1]
        %v262 = vlaneseq
        %v263 = vshrl.u32 %v262, 7
        %v264 = vsub.s32 0, %v263
        %v265 = vrot.slane %v260, %v264
        %v269 = vunpack.c.l.b16 %v242
        %v270 = vunpack.c.l.b16 %v243
        %v271 = vpack.c.b16 %v270, %v269
        %v289 = vunpack.c.l.b16 %v244
        %v290 = vunpack.c.l.b16 %v245
        %v291 = vunpack.c.l.b16 %v246
        %v292 = vunpack.c.l.b16 %v247
        %v293 = vunpack.c.l.b16 %v248
        %v294 = vunpack.c.l.b16 %v249
        %v295 = vunpack.c.l.b16 %v250
        %v296 = vunpack.c.l.b16 %v251
        %v297 = vunpack.c.l.b16 %v252
        %v298 = vunpack.c.l.b16 %v253
        %v299 = vunpack.c.l.b16 %v254
        %v300 = vunpack.c.l.b16 %v255
        %v301 = vunpack.c.l.b16 %v256
        %v302 = vunpack.c.l.b16 %v257
        %v303 = vunpack.c.l.b16 %v258
        %v304 = vunpack.c.l.b16 %v259
        %v305 = vpack.c.b16 %v290, %v289
        %v306 = vpack.c.b16 %v292, %v291
        %v307 = vpack.c.b16 %v294, %v293
        %v308 = vpack.c.b16 %v296, %v295
        %v309 = vpack.c.b16 %v298, %v297
        %v310 = vpack.c.b16 %v300, %v299
        %v311 = vpack.c.b16 %v302, %v301
        %v312 = vpack.c.b16 %v304, %v303
        %321 = vmatprep.subr.bf16.mxu0 0
        %322 = vmatpush1.bf16.msra.mxu0 %v312
        %323 = vmatprep.subr.bf16.mxu0 0
        %324 = vmatpush1.bf16.msra.mxu0 %v311
        %325 = vmatprep.subr.bf16.mxu0 0
        %326 = vmatpush1.bf16.msra.mxu0 %v310
        %327 = vmatprep.subr.bf16.mxu0 0
        %328 = vmatpush1.bf16.msra.mxu0 %v309
        %329 = vmatprep.subr.bf16.mxu0 0
        %330 = vmatpush1.bf16.msra.mxu0 %v308
        %331 = vmatprep.subr.bf16.mxu0 0
        %332 = vmatpush1.bf16.msra.mxu0 %v307
        %333 = vmatprep.subr.bf16.mxu0 0
        %334 = vmatpush1.bf16.msra.mxu0 %v306
        %335 = vmatprep.subr.bf16.mxu0 0
        %336 = vmatpush1.bf16.msra.mxu0 %v305
        %337 = vmatprep.subr.bf16.mxu0 0
        %338 = vmatpush2.bf16.msra.mxu0 0
        %339 = vmatprep.subr.bf16.mxu0 0
        %340 = vmatpush2.bf16.msra.mxu0 0
        %341 = vmatprep.subr.bf16.mxu0 0
        %342 = vmatpush2.bf16.msra.mxu0 0
        %343 = vmatprep.subr.bf16.mxu0 0
        %344 = vmatpush2.bf16.msra.mxu0 0
        %345 = vmatprep.subr.bf16.mxu0 0
        %346 = vmatpush2.bf16.msra.mxu0 0
        %347 = vmatprep.subr.bf16.mxu0 0
        %348 = vmatpush2.bf16.msra.mxu0 0
        %349 = vmatprep.subr.bf16.mxu0 0
        %350 = vmatpush2.bf16.msra.mxu0 0
        %351 = vmatprep.subr.bf16.mxu0 0
        %352 = vmatpush2.bf16.msra.mxu0 0
        %353 = vmatprep.mubr.bf16.mxu0 0
        %354 = vmatmul.mubr.bf16.gmra.mxu0 %v271
        %v355 = vpop.f32.mrf.mxu0
        %v356 = vadd.f32 %v265, %v355
        %v357 = vpop.f32.mrf.mxu0
        %v358 = vpop.f32.mrf.mxu0
        %v359 = vadd.f32 %v265, %v358
        %v360 = vpop.f32.mrf.mxu0
        %361 = vdwg.mxu0
        %v362 = vpack.c.bf16 %v359, %v356
        %v364 = vunpack.c.l.b16 %v362
        %v365 = vunpack.c.h.b16 %v362
        %v366 = vpack.c.b16 %v364, %v364
        %v367 = vpack.c.b16 %v365, %v365
        %370 = vst [vmem:[%s235] sm:$0xf] %v366
        %371 = vst [vmem:[%s235 + $0x4] sm:$0xf] %v367
        %s372 = sand.u32 %s121, 1
        %s373 = scalar_lea.sflag [#allocation4], %s372
        %s374 = sand.u32 %s121, 1
        %s375 = smul.addr %s374, 8
        %s376 = scalar_lea.vmem [#allocation7], %s375
        // Predicated region
        $region41: #{tpu_custom_call.1} parent=31 // pred_check
          %p377 = pneg %p131
        $region42: #{tpu_custom_call.1} parent=31 // pred_check_branch
          %379 = sbr.rel (%p377) target = $region44
        $region43: #{tpu_custom_call.1} parent=31 // pred_region
          %s380 = smul.u32 2, %s26
          %s382 = ssub.s32 128, 128
          %383 = vsyncadd %s373, %s382
          %s384 = sadd.s32 %s25, %s380
          %s385 = smul.addr %s384, 64
          %s386 = scalar_lea.hbm %s3, %s385
          %s387 = sshll.u32 %s376, 4
          %s388 = int_to_ptr.vmem [resolvable:$true] %s387
          %393 = dma.vmem_to_hbm [thread:$0]  %s388, 128, %s386, %s373, 64, 64, 4
        $region44: #{tpu_custom_call.1} parent=31 // pred_fallthru
          _
      $region32: #{tpu_custom_call.1} parent=5 // pred_fallthru
        _
      %p394 = scmp.le.s32.totalorder 2, %s16
      // Predicated region
      $region45: #{tpu_custom_call.1} parent=5 // pred_check
        %p395 = pneg %p394
      $region46: #{tpu_custom_call.1} parent=5 // pred_check_branch
        %397 = sbr.rel (%p395) target = $region48
      $region47: #{tpu_custom_call.1} parent=5 // pred_region
        %s398 = ssub.s32 %s16, 2
        // Predicated region
        $region49: #{tpu_custom_call.1} parent=47 // pred_check
          %p399 = pneg %p137
        $region50: #{tpu_custom_call.1} parent=47 // pred_check_branch
          %401 = sbr.rel (%p399) target = $region52
        $region51: #{tpu_custom_call.1} parent=47 // pred_region
          %s402 = sand.u32 %s122, 1
          %s403 = scalar_lea.sflag [#allocation4], %s402
          %s404 = sand.u32 %s122, 1
          %s405 = smul.addr %s404, 8
          %s406 = scalar_lea.vmem [#allocation7], %s405
          %407 = dma.done %s403, 128
        $region52: #{tpu_custom_call.1} parent=47 // pred_fallthru
          _
      $region48: #{tpu_custom_call.1} parent=5 // pred_fallthru
        _
    $region6: #{tpu_custom_call.1} parent=1 // loop_footer
      %s20 = sadd.s32 1, %s16
    $region7: #{tpu_custom_call.1} parent=1 // loop_footer_branch
      %15 = sbr.rel target = $region3
    $region8: #{tpu_custom_call.1} parent=1 // loop_exit
      _
    %408 = vsyncpa [#allocation3], 1
    %s409 = scalar_lea.sflag [#allocation3], 1
    %410 = vsyncpa %s409, 1
    %411 = vsyncpa [#allocation6], 1
    %412 = vsyncpa [#allocation4], 1
    %s413 = scalar_lea.sflag [#allocation4], 1
    %414 = vsyncpa %s413, 1

</llo_original>
